<compile_context>
chip_gen: v6e
topology: v6e:2x2x1
jax: 0.10.0
libtpu: 0.0.40
codegen_flags: <defaults>
</compile_context>

<pallas_src>
import jax
import jax.numpy as jnp
from jax import lax
from jax.experimental import pallas as pl
from jax.experimental.pallas import tpu as pltpu


# --------------------- hardware introspection ------------------------------

def _tpu_vmem_and_cores():
    """Return (per-core VMEM bytes, #TensorCores/chip) with safe fallbacks."""
    vmem = 64 * 1024 * 1024          # conservative fallback (v7x per-TC size)
    cores = 1
    try:
        info = pltpu.get_tpu_info()
        vmem = int(getattr(info, "vmem_capacity_bytes", vmem))
        cores = int(getattr(info, "num_cores",
                            getattr(info, "tensorcores_per_chip", cores)))
    except Exception:
        pass
    try:
        kind = jax.devices()[0].device_kind.lower()
        if "v7" in kind:
            cores = max(cores, 2)
    except Exception:
        pass
    return vmem, cores


def _pick_batch_block(n, nb_max, num_cores):
    """Pick batch block nb and grid extent; prefer >=2 (even) grid on 2-TC chips."""
    nb_max = max(1, min(nb_max, n))
    if num_cores >= 2 and n >= 2:
        nb = min(nb_max, pl.cdiv(n, 2))          # both TensorCores get work
        grid_n = pl.cdiv(n, nb)
        if grid_n > 1 and grid_n % 2 == 1 and grid_n < n:
            nb2 = max(1, pl.cdiv(n, grid_n + 1))  # try to make grid even
            g2 = pl.cdiv(n, nb2)
            if g2 % 2 == 0:
                nb, grid_n = nb2, g2
    else:
        nb = nb_max                               # single TC: biggest block
        grid_n = pl.cdiv(n, nb)
    return nb, grid_n


# --------------------------- kernels ----------------------------------------

def _se_fused_kernel(x_ref, w1t_ref, w2t_ref, o_ref):
    # x_ref:   (nb, C, HW);  w1t_ref: (C, C_red) (1/HW folded in);  w2t_ref: (C_red, C)
    # Global average pool (sum; mean's 1/HW folded into w1t), f32 accumulation
    # without materializing an f32 copy of the tile.
    pooled = jnp.sum(x_ref[...], axis=-1, dtype=jnp.float32)            # (nb, C)
    h = jnp.maximum(
        jnp.dot(pooled, w1t_ref[...], preferred_element_type=jnp.float32), 0.0)
    s = jax.nn.sigmoid(
        jnp.dot(h, w2t_ref[...], preferred_element_type=jnp.float32))   # (nb, C)
    s = s.astype(x_ref.dtype)  # bf16 fast path on v6e/v7x; no-op for f32
    # Re-read x from VMEM (not kept live across the matmuls); fused scale.
    o_ref[...] = (x_ref[...] * s[:, :, None]).astype(o_ref.dtype)


def _make_pool_kernel(hw, hw_tile):
    """Pass 1 of the spatially-tiled path: accumulate pooled sums over HW tiles."""
    need_mask = (hw % hw_tile) != 0

    def kernel(x_ref, pooled_ref, acc_ref):
        k = pl.program_id(1)

        @pl.when(k == 0)
        def _():
            acc_ref[...] = jnp.zeros_like(acc_ref)

        x = x_ref[...]
        if need_mask:  # mask garbage lanes of the ragged last HW tile
            idx = k * hw_tile + lax.broadcasted_iota(jnp.int32, x.shape, 2)
            x = jnp.where(idx < hw, x, jnp.zeros_like(x))
        acc_ref[...] += jnp.sum(x, axis=-1, dtype=jnp.float32)

        @pl.when(k == pl.num_programs(1) - 1)
        def _():
            pooled_ref[...] = acc_ref[...][:, None, :]      # (nb, 1, C)

    return kernel


def _se_apply_kernel(x_ref, s_ref, o_ref):
    # x_ref: (nb, C, hw_tile), s_ref: (nb, C, 1) broadcast along the lanes.
    o_ref[...] = (x_ref[...] * s_ref[...].astype(x_ref.dtype)).astype(o_ref.dtype)


# --------------------------- wrapper ----------------------------------------

def se_block(x_nchw, w1, w2, *, force_spatial_tiling=False, spatial_tile=None):
    """SEBlock forward.  w1: (C_red, C), w2: (C, C_red) -- 1x1 conv weights."""
    n, c, h, w = x_nchw.shape
    c_red = w1.shape[0]
    hw = h * w
    itemsize = jnp.dtype(x_nchw.dtype).itemsize

    # No padding / slicing: blocks use the full HW extent (lane raggedness is
    # handled by masked tail stores, far cheaper than extra HBM passes).
    x_flat = x_nchw.reshape(n, c, hw)

    # Pre-transpose weights once at trace time; fold 1/HW (mean) into w1.
    w1t = (w1.astype(jnp.float32) * (1.0 / hw)).T     # (C, C_red)
    w2t = w2.astype(jnp.float32).T                    # (C_red, C)

    vmem_cap, num_cores = _tpu_vmem_and_cores()
    vmem_limit = max(16 * 1024 * 1024, min(vmem_cap // 2, 64 * 1024 * 1024))
    # x + out blocks, each double-buffered; weights / scratch are tiny.
    block_budget = int(0.80 * vmem_limit) // 4

    row_bytes = c * hw * itemsize
    one_pass = (row_bytes <= block_budget) and not force_spatial_tiling

    if one_pass:
        nb, grid_n = _pick_batch_block(n, block_budget // row_bytes, num_cores)
        out_flat = pl.pallas_call(
            _se_fused_kernel,
            out_shape=jax.ShapeDtypeStruct((n, c, hw), x_nchw.dtype),
            grid_spec=pltpu.PrefetchScalarGridSpec(
                num_scalar_prefetch=0,
                grid=(grid_n,),
                in_specs=[
                    pl.BlockSpec((nb, c, hw), lambda i: (i, 0, 0)),
                    pl.BlockSpec((c, c_red), lambda i: (0, 0)),   # resident
                    pl.BlockSpec((c_red, c), lambda i: (0, 0)),   # resident
                ],
                out_specs=pl.BlockSpec((nb, c, hw), lambda i: (i, 0, 0)),
            ),
            compiler_params=pltpu.CompilerParams(
                dimension_semantics=("parallel",),
                vmem_limit_bytes=vmem_limit),
            input_output_aliases={0: 0},
            cost_estimate=pl.CostEstimate(
                flops=4 * n * c * c_red + n * c * hw,
                transcendentals=n * c,
                bytes_accessed=2 * n * c * hw * itemsize),
        )(x_flat, w1t, w2t)
        return out_flat.reshape(n, c, h, w)

    # ---- spatially-tiled two-pass path (one row of x does not fit VMEM) ----
    if spatial_tile is None:
        hw_tile = max(128, (block_budget // (c * itemsize)) // 128 * 128)
    else:
        hw_tile = spatial_tile      # must be a multiple of 128 (or >= HW)
    hw_tile = min(hw_tile, hw)
    grid_hw = pl.cdiv(hw, hw_tile)
    nb, grid_n = _pick_batch_block(
        n, max(1, block_budget // (c * hw_tile * itemsize)), num_cores)

    # Pass 1: tiled global-average-pool (f32 accumulator in VMEM scratch).
    pooled3 = pl.pallas_call(
        _make_pool_kernel(hw, hw_tile),
        out_shape=jax.ShapeDtypeStruct((n, 1, c), jnp.float32),
        grid_spec=pltpu.PrefetchScalarGridSpec(
            num_scalar_prefetch=0,
            grid=(grid_n, grid_hw),
            in_specs=[pl.BlockSpec((nb, c, hw_tile), lambda i, k: (i, 0, k))],
            out_specs=pl.BlockSpec((nb, 1, c), lambda i, k: (i, 0, 0)),
            scratch_shapes=[pltpu.VMEM((nb, c), jnp.float32)],
        ),
        compiler_params=pltpu.CompilerParams(
            dimension_semantics=("parallel", "arbitrary"),
            vmem_limit_bytes=vmem_limit),
        cost_estimate=pl.CostEstimate(
            flops=n * c * hw, transcendentals=0,
            bytes_accessed=n * c * hw * itemsize),
    )(x_flat)

    # Tiny squeeze/excite on (N, C): negligible vs. the two HBM sweeps.
    pooled = pooled3[:, 0, :]                                 # (N, C) f32 sums
    hsq = jnp.maximum(pooled @ w1t, 0.0)                      # 1/HW folded in w1t
    scale = jax.nn.sigmoid(hsq @ w2t).astype(x_nchw.dtype)[:, :, None]  # (N, C, 1)

    # Pass 2: out = x * scale, tiled over HW.
    out_flat = pl.pallas_call(
        _se_apply_kernel,
        out_shape=jax.ShapeDtypeStruct((n, c, hw), x_nchw.dtype),
        grid_spec=pltpu.PrefetchScalarGridSpec(
            num_scalar_prefetch=0,
            grid=(grid_n, grid_hw),
            in_specs=[
                pl.BlockSpec((nb, c, hw_tile), lambda i, k: (i, 0, k)),
                pl.BlockSpec((nb, c, 1), lambda i, k: (i, 0, 0)),
            ],
            out_specs=pl.BlockSpec((nb, c, hw_tile), lambda i, k: (i, 0, k)),
        ),
        compiler_params=pltpu.CompilerParams(
            dimension_semantics=("parallel", "parallel"),
            vmem_limit_bytes=vmem_limit),
        input_output_aliases={0: 0},
        cost_estimate=pl.CostEstimate(
            flops=n * c * hw, transcendentals=0,
            bytes_accessed=2 * n * c * hw * itemsize),
    )(x_flat, scale)
    return out_flat.reshape(n, c, h, w)


def se_block_ref(x_nchw, w1, w2):
    # Pure-JAX reference mirroring the PyTorch forward.
    pooled = jnp.mean(x_nchw, axis=(2, 3))                    # (N, C)
    h = jnp.maximum(pooled @ w1.T, 0.0)                       # (N, C_red)
    s = jax.nn.sigmoid(h @ w2.T)                              # (N, C)
    return x_nchw * s[:, :, None, None]


if __name__ == "__main__":
    key = jax.random.PRNGKey(0)
    kx, k1, k2, kx2, kx3 = jax.random.split(key, 5)

    # in_channels must be >= 16 so that int(in_channels / 16) >= 1.
    N, C, H, W = 2, 32, 16, 16
    C_red = C // 16                                           # = 2

    x = jax.random.normal(kx, (N, C, H, W), dtype=jnp.float32)
    # Conv2d 1x1 weights (no bias) as plain matrices.
    w1 = jax.random.normal(k1, (C_red, C), dtype=jnp.float32) * 0.1
    w2 = jax.random.normal(k2, (C, C_red), dtype=jnp.float32) * 0.1

    se = jax.jit(se_block, static_argnames=("force_spatial_tiling", "spatial_tile"))

    # 1) Fused single-pass path (block last dim = full HW, no pad/slice).
    out = jax.block_until_ready(se(x, w1, w2))
    ref = se_block_ref(x, w1, w2)
    assert out.shape == x.shape
    assert jnp.allclose(out, ref, atol=1e-5, rtol=1e-5)

    # 2) HW not a multiple of 128 + batch not matching the block (ragged grid).
    x2 = jax.random.normal(kx2, (3, C, 10, 10), dtype=jnp.float32)
    out2 = jax.block_until_ready(se(x2, w1, w2))
    assert jnp.allclose(out2, se_block_ref(x2, w1, w2), atol=1e-5, rtol=1e-5)

    # 3) Force the spatially-tiled two-pass fallback (large-feature-map path),
    #    with a ragged last HW tile (400 = 3*128 + 16) to exercise the mask.
    x3 = jax.random.normal(kx3, (2, C, 20, 20), dtype=jnp.float32)
    out3 = jax.block_until_ready(
        se(x3, w1, w2, force_spatial_tiling=True, spatial_tile=128))
    assert jnp.allclose(out3, se_block_ref(x3, w1, w2), atol=1e-5, rtol=1e-5)

    print("KERNEL_OK")
</pallas_src>

<mosaic_0001>
module attributes {stable_mosaic.version = 11 : i64} {
  func.func @_se_fused_kernel(%arg0: i32, %arg1: memref<2x32x256xf32, #tpu.memory_space<vmem>>, %arg2: memref<32x2xf32, #tpu.memory_space<vmem>>, %arg3: memref<2x32xf32, #tpu.memory_space<vmem>>, %arg4: memref<2x32x256xf32, #tpu.memory_space<vmem>>) attributes {dimension_semantics = [#tpu.dimension_semantics<parallel>], iteration_bounds = array<i64: 1>, scalar_prefetch = 0 : i64, scratch_operands = 0 : i64, tpu.core_type = #tpu.core_type<tc>, window_params = [{transform_indices = @transform_0, window_bounds = array<i64: 2, 32, 256>}, {pipeline_mode = #tpu.pipeline_mode<synchronous>, transform_indices = @transform_1, window_bounds = array<i64: 32, 2>}, {pipeline_mode = #tpu.pipeline_mode<synchronous>, transform_indices = @transform_2, window_bounds = array<i64: 2, 32>}, {transform_indices = @transform_3, window_bounds = array<i64: 2, 32, 256>}]} {
    %c0 = arith.constant 0 : index
    %c0_0 = arith.constant 0 : index
    %c0_1 = arith.constant 0 : index
    %0 = vector.load %arg1[%c0, %c0_0, %c0_1] : memref<2x32x256xf32, #tpu.memory_space<vmem>>, vector<2x32x256xf32>
    %cst = arith.constant dense<0.000000e+00> : vector<2x32xf32>
    %1 = vector.multi_reduction <add>, %0, %cst [2] : vector<2x32x256xf32> to vector<2x32xf32>
    %c0_2 = arith.constant 0 : index
    %c0_3 = arith.constant 0 : index
    %2 = vector.load %arg2[%c0_2, %c0_3] : memref<32x2xf32, #tpu.memory_space<vmem>>, vector<32x2xf32>
    %cst_4 = arith.constant dense<0.000000e+00> : vector<2x2xf32>
    %3 = tpu.matmul %1, %2, %cst_4 {dimension_numbers = #tpu.dot_dimension_numbers<[1], [0], [0], [1], [0, 0, 1, 1], [], []>} : vector<2x32xf32>, vector<32x2xf32>, vector<2x2xf32> -> vector<2x2xf32>
    %cst_5 = arith.constant 0.000000e+00 : f32
    %4 = vector.broadcast %cst_5 : f32 to vector<2x2xf32>
    %5 = arith.maximumf %3, %4 : vector<2x2xf32>
    %c0_6 = arith.constant 0 : index
    %c0_7 = arith.constant 0 : index
    %6 = vector.load %arg3[%c0_6, %c0_7] : memref<2x32xf32, #tpu.memory_space<vmem>>, vector<2x32xf32>
    %cst_8 = arith.constant dense<0.000000e+00> : vector<2x32xf32>
    %7 = tpu.matmul %5, %6, %cst_8 {dimension_numbers = #tpu.dot_dimension_numbers<[1], [0], [0], [1], [0, 0, 1, 1], [], []>} : vector<2x2xf32>, vector<2x32xf32>, vector<2x32xf32> -> vector<2x32xf32>
    %8 = arith.negf %7 : vector<2x32xf32>
    %9 = math.exp %8 : vector<2x32xf32>
    %cst_9 = arith.constant 1.000000e+00 : f32
    %10 = vector.broadcast %cst_9 : f32 to vector<2x32xf32>
    %11 = arith.addf %10, %9 : vector<2x32xf32>
    %12 = arith.divf %10, %11 : vector<2x32xf32>
    %c0_10 = arith.constant 0 : index
    %c0_11 = arith.constant 0 : index
    %c0_12 = arith.constant 0 : index
    %13 = vector.load %arg1[%c0_10, %c0_11, %c0_12] : memref<2x32x256xf32, #tpu.memory_space<vmem>>, vector<2x32x256xf32>
    %14 = vector.shape_cast %12 : vector<2x32xf32> to vector<2x32x1xf32>
    %15 = vector.broadcast %14 : vector<2x32x1xf32> to vector<2x32x256xf32>
    %16 = arith.mulf %13, %15 : vector<2x32x256xf32>
    %c0_13 = arith.constant 0 : index
    %c0_14 = arith.constant 0 : index
    %c0_15 = arith.constant 0 : index
    %17 = vector.load %arg4[%c0_13, %c0_14, %c0_15] : memref<2x32x256xf32, #tpu.memory_space<vmem>>, vector<2x32x256xf32>
    tpu.vector_store %arg4[%c0_13, %c0_14, %c0_15], %16 {strides = array<i32>} : memref<2x32x256xf32, #tpu.memory_space<vmem>>, vector<2x32x256xf32>,
    return
  }
  func.func @transform_0(%arg0: i32) -> (i32, i32, i32) {
    %c0_i32 = arith.constant 0 : i32
    %c0_i32_0 = arith.constant 0 : i32
    %c0_i32_1 = arith.constant 0 : i32
    return %arg0, %c0_i32, %c0_i32_0 : i32, i32, i32
  }
  func.func @transform_1(%arg0: i32) -> (i32, i32) {
    %c0_i32 = arith.constant 0 : i32
    %c0_i32_0 = arith.constant 0 : i32
    %c0_i32_1 = arith.constant 0 : i32
    return %c0_i32, %c0_i32_0 : i32, i32
  }
  func.func @transform_2(%arg0: i32) -> (i32, i32) {
    %c0_i32 = arith.constant 0 : i32
    %c0_i32_0 = arith.constant 0 : i32
    %c0_i32_1 = arith.constant 0 : i32
    return %c0_i32, %c0_i32_0 : i32, i32
  }
  func.func @transform_3(%arg0: i32) -> (i32, i32, i32) {
    %c0_i32 = arith.constant 0 : i32
    %c0_i32_0 = arith.constant 0 : i32
    %c0_i32_1 = arith.constant 0 : i32
    return %arg0, %c0_i32, %c0_i32_0 : i32, i32, i32
  }
}

</mosaic_0001>

<llo_original>
// kernel: se_block.1
$region0: #{se_block.1}
  #allocation0 [shape = 'u32[]', space=smem, size = 0x4, offset = 0x4, fixed_abs, tag = 'smem constant byte address 0x4 - core index']
  #allocation1 [shape = 'u32[144,128]{1,0:T(1,128)}', space=vmem, size = 0x12000, scoped, tag = 'internal scratch']
  %s0 = inlined_call_operand.vmem [shape: f32[2,32,256], index: 0, kind: input, shape index: {}, may-alias: {0,3}]
  %s1 = inlined_call_operand.vmem [shape: f32[32,2], index: 1, kind: input, shape index: {}]
  %s2 = inlined_call_operand.vmem [shape: f32[2,32], index: 2, kind: input, shape index: {}]
  %s3 = inlined_call_operand.vmem [shape: f32[2,32,256], index: 3, kind: output, shape index: {}, may-alias: {0,3}]
  %s4 = sld [smem:[#allocation0]]
  $region22: #{se_block.1} parent=0
    _
  %s6 = ssub.s32 1, %s4
  %s7 = scalar_select 0, %s6, %s4
  // Predicated region
  $region2: #{se_block.1} parent=0 // pred_check
    _
  $region3: #{se_block.1} parent=0 // pred_check_branch
    %9 = sbr.rel (0) target = $region5
  $region4: #{se_block.1} parent=0 // pred_region
    _
  $region5: #{se_block.1} parent=0 // pred_fallthru
    _
  // Predicated region
  $region6: #{se_block.1} parent=0 // pred_check
    _
  $region7: #{se_block.1} parent=0 // pred_check_branch
    %11 = sbr.rel (0) target = $region9
  $region8: #{se_block.1} parent=0 // pred_region
    _
  $region9: #{se_block.1} parent=0 // pred_fallthru
    _
  // Predicated region
  $region10: #{se_block.1} parent=0 // pred_check
    _
  $region11: #{se_block.1} parent=0 // pred_check_branch
    %13 = sbr.rel (0) target = $region13
  $region12: #{se_block.1} parent=0 // pred_region
    _
  $region13: #{se_block.1} parent=0 // pred_fallthru
    _
  %v14 = vld [vmem:[%s0] sm:$0xff]
  %v15 = vld [vmem:[%s0 + $0x8] sm:$0xff]
  %v16 = vld [vmem:[%s0 + $0x10] sm:$0xff]
  %v17 = vld [vmem:[%s0 + $0x18] sm:$0xff]
  %v18 = vld [vmem:[%s0 + $0x20] sm:$0xff]
  %v19 = vld [vmem:[%s0 + $0x28] sm:$0xff]
  %v20 = vld [vmem:[%s0 + $0x30] sm:$0xff]
  %v21 = vld [vmem:[%s0 + $0x38] sm:$0xff]
  %v22 = vld [vmem:[%s0 + $0x40] sm:$0xff]
  %v23 = vld [vmem:[%s0 + $0x48] sm:$0xff]
  %v24 = vld [vmem:[%s0 + $0x50] sm:$0xff]
  %v25 = vld [vmem:[%s0 + $0x58] sm:$0xff]
  %v26 = vld [vmem:[%s0 + $0x60] sm:$0xff]
  %v27 = vld [vmem:[%s0 + $0x68] sm:$0xff]
  %v28 = vld [vmem:[%s0 + $0x70] sm:$0xff]
  %v29 = vld [vmem:[%s0 + $0x78] sm:$0xff]
  %v30 = vadd.f32 %v14, %v15
  %31 = vadd.xlane.f32.xlu0 %v30
  %v32 = vpop.xlane.xlu0 %31
  %v33 = vadd.f32 %v16, %v17
  %34 = vadd.xlane.f32.xlu0 %v33
  %v35 = vpop.xlane.xlu0 %34
  %v36 = vadd.f32 %v18, %v19
  %37 = vadd.xlane.f32.xlu0 %v36
  %v38 = vpop.xlane.xlu0 %37
  %v39 = vadd.f32 %v20, %v21
  %40 = vadd.xlane.f32.xlu0 %v39
  %v41 = vpop.xlane.xlu0 %40
  %v42 = vadd.f32 %v22, %v23
  %43 = vadd.xlane.f32.xlu0 %v42
  %v44 = vpop.xlane.xlu0 %43
  %v45 = vadd.f32 %v24, %v25
  %46 = vadd.xlane.f32.xlu0 %v45
  %v47 = vpop.xlane.xlu0 %46
  %v48 = vadd.f32 %v26, %v27
  %49 = vadd.xlane.f32.xlu0 %v48
  %v50 = vpop.xlane.xlu0 %49
  %v51 = vadd.f32 %v28, %v29
  %52 = vadd.xlane.f32.xlu0 %v51
  %v53 = vpop.xlane.xlu0 %52
  %v54 = vld [vmem:[%s1] sm:$0xff]
  %v55 = vld [vmem:[%s1 + $0x8] sm:$0xff]
  %v56 = vld [vmem:[%s1 + $0x10] sm:$0xff]
  %v57 = vld [vmem:[%s1 + $0x18] sm:$0xff]
  %v66 = vlaneseq
  %v67 = vand.u32 %v66, 127
  %v68 = vlaneseq
  %v69 = vshrl.u32 %v68, 7
  %v70 = vsub.s32 %v67, %v69
  %v71 = vrot.slane %v32, %v70
  %v72 = vadd.s32 %v67, 4294967288
  %v73 = vlaneseq
  %v74 = vshrl.u32 %v73, 7
  %v75 = vsub.s32 %v72, %v74
  %v76 = vrot.slane %v35, %v75
  %vm77 = vcmask 130112
  %v78 = vsel %vm77, %v76, %v71
  %v79 = vadd.s32 %v67, 4294967280
  %v80 = vlaneseq
  %v81 = vshrl.u32 %v80, 7
  %v82 = vsub.s32 %v79, %v81
  %v83 = vrot.slane %v38, %v82
  %vm84 = vcmask 195712
  %v85 = vsel %vm84, %v83, %v78
  %v86 = vadd.s32 %v67, 4294967272
  %v87 = vlaneseq
  %v88 = vshrl.u32 %v87, 7
  %v89 = vsub.s32 %v86, %v88
  %v90 = vrot.slane %v41, %v89
  %vm91 = vcmask 261312
  %v92 = vsel %vm91, %v90, %v85
  %v93 = vlaneseq
  %v94 = vshrl.u32 %v93, 7
  %v95 = vsub.s32 %v67, %v94
  %v96 = vrot.slane %v44, %v95
  %v97 = vlaneseq
  %v98 = vshrl.u32 %v97, 7
  %v99 = vsub.s32 %v72, %v98
  %v100 = vrot.slane %v47, %v99
  %v101 = vsel %vm77, %v100, %v96
  %v102 = vlaneseq
  %v103 = vshrl.u32 %v102, 7
  %v104 = vsub.s32 %v79, %v103
  %v105 = vrot.slane %v50, %v104
  %v106 = vsel %vm84, %v105, %v101
  %v107 = vlaneseq
  %v108 = vshrl.u32 %v107, 7
  %v109 = vsub.s32 %v86, %v108
  %v110 = vrot.slane %v53, %v109
  %v111 = vsel %vm91, %v110, %v106
  %vm112 = vcmask 1041409
  %v113 = vsel %vm112, %v111, %v92
  %vm114 = vcmask 261120
  %v115 = vsel %vm114, %v113, 0
  %117 = vmatprep.subr.mxu0 0.0
  %118 = vmatpush1.msra.mxu0 0.0
  %119 = vmatprep.subr.mxu0 0.0
  %120 = vmatpush1.msra.mxu0 0.0
  %121 = vmatprep.subr.mxu0 0.0
  %122 = vmatpush1.msra.mxu0 0.0
  %123 = vmatprep.subr.mxu0 0.0
  %124 = vmatpush1.msra.mxu0 0.0
  %125 = vmatprep.subr.mxu0 0.0
  %126 = vmatpush1.msra.mxu0 0.0
  %127 = vmatprep.subr.mxu0 0.0
  %128 = vmatpush1.msra.mxu0 0.0
  %129 = vmatprep.subr.mxu0 0.0
  %130 = vmatpush1.msra.mxu0 0.0
  %131 = vmatprep.subr.mxu0 0.0
  %132 = vmatpush1.msra.mxu0 0.0
  %133 = vmatprep.subr.mxu0 0.0
  %134 = vmatpush1.msra.mxu0 0.0
  %135 = vmatprep.subr.mxu0 0.0
  %136 = vmatpush1.msra.mxu0 0.0
  %137 = vmatprep.subr.mxu0 0.0
  %138 = vmatpush1.msra.mxu0 0.0
  %139 = vmatprep.subr.mxu0 0.0
  %140 = vmatpush1.msra.mxu0 0.0
  %141 = vmatprep.subr.mxu0 0.0
  %142 = vmatpush1.msra.mxu0 %v57
  %143 = vmatprep.subr.mxu0 0.0
  %144 = vmatpush1.msra.mxu0 %v56
  %145 = vmatprep.subr.mxu0 0.0
  %146 = vmatpush1.msra.mxu0 %v55
  %147 = vmatprep.subr.mxu0 0.0
  %148 = vmatpush1.msra.mxu0 %v54
  %149 = vmatprep.subr.mxu0 0.0
  %150 = vmatpush2.msra.mxu0 0.0
  %151 = vmatprep.subr.mxu0 0.0
  %152 = vmatpush2.msra.mxu0 0.0
  %153 = vmatprep.subr.mxu0 0.0
  %154 = vmatpush2.msra.mxu0 0.0
  %155 = vmatprep.subr.mxu0 0.0
  %156 = vmatpush2.msra.mxu0 0.0
  %157 = vmatprep.subr.mxu0 0.0
  %158 = vmatpush2.msra.mxu0 0.0
  %159 = vmatprep.subr.mxu0 0.0
  %160 = vmatpush2.msra.mxu0 0.0
  %161 = vmatprep.subr.mxu0 0.0
  %162 = vmatpush2.msra.mxu0 0.0
  %163 = vmatprep.subr.mxu0 0.0
  %164 = vmatpush2.msra.mxu0 0.0
  %165 = vmatprep.subr.mxu0 0.0
  %166 = vmatpush2.msra.mxu0 0.0
  %167 = vmatprep.subr.mxu0 0.0
  %168 = vmatpush2.msra.mxu0 0.0
  %169 = vmatprep.subr.mxu0 0.0
  %170 = vmatpush2.msra.mxu0 0.0
  %171 = vmatprep.subr.mxu0 0.0
  %172 = vmatpush2.msra.mxu0 0.0
  %173 = vmatprep.subr.mxu0 0.0
  %174 = vmatpush2.msra.mxu0 0.0
  %175 = vmatprep.subr.mxu0 0.0
  %176 = vmatpush2.msra.mxu0 0.0
  %177 = vmatprep.subr.mxu0 0.0
  %178 = vmatpush2.msra.mxu0 0.0
  %179 = vmatprep.subr.mxu0 0.0
  %180 = vmatpush2.msra.mxu0 0.0
  %181 = vmatprep.mubr.f32.mxu0 0.0
  %182 = vmatmul.mubr.f32.gmra.mxu0 %v115
  %v183 = vpop.f32.mrf.mxu0
  %v184 = vadd.f32 0.0, %v183
  %v185 = vpop.f32.mrf.mxu0
  %186 = vdwg.mxu0
  %v187 = vmax.f32 %v184, 0.0
  %v188 = vld [vmem:[%s2] sm:$0x3]
  %vm189 = vcmask 15360
  %v191 = vsel %vm189, %v187, 0
  %vm193 = vcmask 1041408
  %v195 = vsel %vm193, %v188, 0
  %197 = vmatprep.subr.mxu0 0.0
  %198 = vmatpush1.msra.mxu0 0.0
  %199 = vmatprep.subr.mxu0 0.0
  %200 = vmatpush1.msra.mxu0 0.0
  %201 = vmatprep.subr.mxu0 0.0
  %202 = vmatpush1.msra.mxu0 0.0
  %203 = vmatprep.subr.mxu0 0.0
  %204 = vmatpush1.msra.mxu0 0.0
  %205 = vmatprep.subr.mxu0 0.0
  %206 = vmatpush1.msra.mxu0 0.0
  %207 = vmatprep.subr.mxu0 0.0
  %208 = vmatpush1.msra.mxu0 0.0
  %209 = vmatprep.subr.mxu0 0.0
  %210 = vmatpush1.msra.mxu0 0.0
  %211 = vmatprep.subr.mxu0 0.0
  %212 = vmatpush1.msra.mxu0 0.0
  %213 = vmatprep.subr.mxu0 0.0
  %214 = vmatpush1.msra.mxu0 0.0
  %215 = vmatprep.subr.mxu0 0.0
  %216 = vmatpush1.msra.mxu0 0.0
  %217 = vmatprep.subr.mxu0 0.0
  %218 = vmatpush1.msra.mxu0 0.0
  %219 = vmatprep.subr.mxu0 0.0
  %220 = vmatpush1.msra.mxu0 0.0
  %221 = vmatprep.subr.mxu0 0.0
  %222 = vmatpush1.msra.mxu0 0.0
  %223 = vmatprep.subr.mxu0 0.0
  %224 = vmatpush1.msra.mxu0 0.0
  %225 = vmatprep.subr.mxu0 0.0
  %226 = vmatpush1.msra.mxu0 0.0
  %227 = vmatprep.subr.mxu0 0.0
  %228 = vmatpush1.msra.mxu0 %v195
  %229 = vmatprep.subr.mxu0 0.0
  %230 = vmatpush2.msra.mxu0 0.0
  %231 = vmatprep.subr.mxu0 0.0
  %232 = vmatpush2.msra.mxu0 0.0
  %233 = vmatprep.subr.mxu0 0.0
  %234 = vmatpush2.msra.mxu0 0.0
  %235 = vmatprep.subr.mxu0 0.0
  %236 = vmatpush2.msra.mxu0 0.0
  %237 = vmatprep.subr.mxu0 0.0
  %238 = vmatpush2.msra.mxu0 0.0
  %239 = vmatprep.subr.mxu0 0.0
  %240 = vmatpush2.msra.mxu0 0.0
  %241 = vmatprep.subr.mxu0 0.0
  %242 = vmatpush2.msra.mxu0 0.0
  %243 = vmatprep.subr.mxu0 0.0
  %244 = vmatpush2.msra.mxu0 0.0
  %245 = vmatprep.subr.mxu0 0.0
  %246 = vmatpush2.msra.mxu0 0.0
  %247 = vmatprep.subr.mxu0 0.0
  %248 = vmatpush2.msra.mxu0 0.0
  %249 = vmatprep.subr.mxu0 0.0
  %250 = vmatpush2.msra.mxu0 0.0
  %251 = vmatprep.subr.mxu0 0.0
  %252 = vmatpush2.msra.mxu0 0.0
  %253 = vmatprep.subr.mxu0 0.0
  %254 = vmatpush2.msra.mxu0 0.0
  %255 = vmatprep.subr.mxu0 0.0
  %256 = vmatpush2.msra.mxu0 0.0
  %257 = vmatprep.subr.mxu0 0.0
  %258 = vmatpush2.msra.mxu0 0.0
  %259 = vmatprep.subr.mxu0 0.0
  %260 = vmatpush2.msra.mxu0 0.0
  %261 = vmatprep.mubr.f32.mxu0 0.0
  %262 = vmatmul.mubr.f32.gmra.mxu0 %v191
  %v263 = vpop.f32.mrf.mxu0
  %v264 = vadd.f32 0.0, %v263
  %v265 = vpop.f32.mrf.mxu0
  %266 = vdwg.mxu0
  %v267 = vxor.u32 %v264, 2147483648
  %v268 = vmul.f32 %v267, 1.442695
  %v269 = vpow.pop %v268
  %v270 = vadd.f32 %v269, 1.0
  %v271 = vrcp.pop %v270
  %v272 = vmul.f32 1.0, %v271
  %v273 = vlaneseq
  %v274 = vshrl.u32 %v273, 7
  %v275 = vsub.s32 0, %v274
  %v276 = vrot.slane %v272, %v275
  %278 = vbcast.lane.b32.xlu0 %v276, 256
  %v279 = vpop.permute.xlu0 %278
  %s281 = sor.u32 256, 8
  %282 = vbcast.lane.b32.xlu0 %v276, %s281
  %v283 = vpop.permute.xlu0 %282
  %s285 = sor.u32 256, 16
  %286 = vbcast.lane.b32.xlu0 %v276, %s285
  %v287 = vpop.permute.xlu0 %286
  %s289 = sor.u32 256, 24
  %290 = vbcast.lane.b32.xlu0 %v276, %s289
  %v291 = vpop.permute.xlu0 %290
  %v292 = vlaneseq
  %v293 = vshrl.u32 %v292, 7
  %v294 = vsub.s32 1, %v293
  %v295 = vrot.slane %v272, %v294
  %297 = vbcast.lane.b32.xlu0 %v295, 256
  %v298 = vpop.permute.xlu0 %297
  %s300 = sor.u32 256, 8
  %301 = vbcast.lane.b32.xlu0 %v295, %s300
  %v302 = vpop.permute.xlu0 %301
  %s304 = sor.u32 256, 16
  %305 = vbcast.lane.b32.xlu0 %v295, %s304
  %v306 = vpop.permute.xlu0 %305
  %s308 = sor.u32 256, 24
  %309 = vbcast.lane.b32.xlu0 %v295, %s308
  %v310 = vpop.permute.xlu0 %309
  %v311 = vmul.f32 %v14, %v279
  %v312 = vmul.f32 %v15, %v279
  %v313 = vmul.f32 %v16, %v283
  %v314 = vmul.f32 %v17, %v283
  %v315 = vmul.f32 %v18, %v287
  %v316 = vmul.f32 %v19, %v287
  %v317 = vmul.f32 %v20, %v291
  %v318 = vmul.f32 %v21, %v291
  %v319 = vmul.f32 %v22, %v298
  %v320 = vmul.f32 %v23, %v298
  %v321 = vmul.f32 %v24, %v302
  %v322 = vmul.f32 %v25, %v302
  %v323 = vmul.f32 %v26, %v306
  %v324 = vmul.f32 %v27, %v306
  %v325 = vmul.f32 %v28, %v310
  %v326 = vmul.f32 %v29, %v310
  %327 = vst [vmem:[%s3] sm:$0xff] %v311
  %328 = vst [vmem:[%s3 + $0x8] sm:$0xff] %v312
  %329 = vst [vmem:[%s3 + $0x10] sm:$0xff] %v313
  %330 = vst [vmem:[%s3 + $0x18] sm:$0xff] %v314
  %331 = vst [vmem:[%s3 + $0x20] sm:$0xff] %v315
  %332 = vst [vmem:[%s3 + $0x28] sm:$0xff] %v316
  %333 = vst [vmem:[%s3 + $0x30] sm:$0xff] %v317
  %334 = vst [vmem:[%s3 + $0x38] sm:$0xff] %v318
  %335 = vst [vmem:[%s3 + $0x40] sm:$0xff] %v319
  %336 = vst [vmem:[%s3 + $0x48] sm:$0xff] %v320
  %337 = vst [vmem:[%s3 + $0x50] sm:$0xff] %v321
  %338 = vst [vmem:[%s3 + $0x58] sm:$0xff] %v322
  %339 = vst [vmem:[%s3 + $0x60] sm:$0xff] %v323
  %340 = vst [vmem:[%s3 + $0x68] sm:$0xff] %v324
  %341 = vst [vmem:[%s3 + $0x70] sm:$0xff] %v325
  %342 = vst [vmem:[%s3 + $0x78] sm:$0xff] %v326
  // Predicated region
  $region14: #{se_block.1} parent=0 // pred_check
    _
  $region15: #{se_block.1} parent=0 // pred_check_branch
    %344 = sbr.rel (0) target = $region17
  $region16: #{se_block.1} parent=0 // pred_region
    _
  $region17: #{se_block.1} parent=0 // pred_fallthru
    _
  // Predicated region
  $region18: #{se_block.1} parent=0 // pred_check
    _
  $region19: #{se_block.1} parent=0 // pred_check_branch
    %346 = sbr.rel (0) target = $region21
  $region20: #{se_block.1} parent=0 // pred_region
    _
  $region21: #{se_block.1} parent=0 // pred_fallthru
    _

</llo_original>
